<compile_context>
chip_gen: v5e
topology: v5e:2x2
jax: 0.10.0
libtpu: 0.0.40
codegen_flags: <defaults>
</compile_context>

<pallas_src>
import jax
import jax.numpy as jnp
from jax.experimental import pallas as pl
from jax.experimental.pallas import tpu as pltpu


# ----------------------------------------------------------------------------
# Linear kernel (used for the hoisted layer-0 input projection)
# ----------------------------------------------------------------------------
def _linear_kernel(x_ref, w_ref, b_ref, o_ref):
    o_ref[...] = (jnp.dot(x_ref[...], w_ref[...],
                          preferred_element_type=jnp.float32)
                  + b_ref[...]).astype(o_ref.dtype)


def linear(x, w, b, *, block_m=512):
    """x: (M, K); w: (K, N); b: (1, N) -> (M, N) f32."""
    M, K = x.shape
    N = w.shape[1]
    if M <= block_m:
        return pl.pallas_call(
            _linear_kernel,
            out_shape=jax.ShapeDtypeStruct((M, N), jnp.float32),
        )(x, w, b)
    # M-tiled, weight resident, parallel over rows (matters at prod sizes).
    # TODO(synk): add a K-split grid axis + f32 VMEM accumulator for v7x-sized
    # D0/4F where the full (K, N) weight would blow the 64 MiB VMEM budget.
    return pl.pallas_call(
        _linear_kernel,
        out_shape=jax.ShapeDtypeStruct((M, N), jnp.float32),
        grid_spec=pltpu.PrefetchScalarGridSpec(
            num_scalar_prefetch=0,
            grid=(pl.cdiv(M, block_m),),
            in_specs=[pl.BlockSpec((block_m, K), lambda i: (i, 0)),
                      pl.BlockSpec((K, N), lambda i: (0, 0)),
                      pl.BlockSpec((1, N), lambda i: (0, 0))],
            out_specs=pl.BlockSpec((block_m, N), lambda i: (i, 0)),
        ),
        compiler_params=pltpu.CompilerParams(
            dimension_semantics=("parallel",)),
    )(x, w, b)


# ----------------------------------------------------------------------------
# Fused multi-layer LSTM recurrence (+ return_sequences projection) kernel
# ----------------------------------------------------------------------------
def _make_fused_lstm_kernel(num_layers, nf, tb, return_sequences,
                            compute_dtype):
    L = num_layers

    def kernel(xproj_ref, wh0_ref, wxd_ref, whd_ref, bd_ref, wrs_ref, brs_ref,
               h0_ref, c0_ref, out_ref, hT_ref, cT_ref, h_scr, c_scr):
        tblk = pl.program_id(1)          # time-block axis ("arbitrary")

        # (Re)initialize recurrent state at the start of each batch block's
        # time sweep.
        @pl.when(tblk == 0)
        def _():
            h_scr[...] = h0_ref[...]
            c_scr[...] = c0_ref[...]

        bb = xproj_ref.shape[1]

        # ---- loop-invariant loads (weights pre-cast in the wrapper) ---------
        wh0 = wh0_ref[...]                                    # (F, 4F)
        wxd = [wxd_ref[l] for l in range(L - 1)]              # (F, 4F) each
        whd = [whd_ref[l] for l in range(L - 1)]              # (F, 4F) each
        bd = [bd_ref[l] for l in range(L - 1)]                # (1, 4F) f32
        if return_sequences:
            wrs = [wrs_ref[l] for l in range(L)]              # (F, D0) each
            brs = brs_ref[...]                                # (1, D0) f32

        # Single dense load of the streamed input block; per-t slices stay in
        # vregs instead of sublane-sparse per-t vld.
        xp = xproj_ref[...]                                   # (tb, bb, 4F)

        # Lane mask selecting the cellgate (tanh) lanes of the (bb, 4F) gates.
        lane = jax.lax.broadcasted_iota(jnp.int32, (bb, 4 * nf), 1)
        cell_mask = (lane >= 2 * nf) & (lane < 3 * nf)
        half = jnp.float32(0.5)

        def act_gates(gates, c_prev):
            # One tanh pass for all four gates:
            #   sigmoid(x) = 0.5 * tanh(0.5 * x) + 0.5
            g_scaled = jnp.where(cell_mask, gates, gates * half)
            t = jnp.tanh(g_scaled)
            a = jnp.where(cell_mask, t, t * half + half)
            ingate = a[:, 0 * nf:1 * nf]
            forgetgate = a[:, 1 * nf:2 * nf]
            cellgate = a[:, 2 * nf:3 * nf]
            outgate = a[:, 3 * nf:4 * nf]
            c_new = c_prev * forgetgate + ingate * cellgate
            h_new = outgate * jnp.tanh(c_new)
            return h_new, c_new

        # Recurrent state lives in registers across the (fully unrolled) time
        # loop; VMEM scratch only carries it across grid steps.
        hs = [h_scr[l] for l in range(L)]
        cs = [c_scr[l] for l in range(L)]
        outs = []
        for t in range(tb):
            # Layer 0: x-projection (with both biases) precomputed outside.
            gates = xp[t].astype(jnp.float32) + jnp.dot(
                hs[0].astype(compute_dtype), wh0,
                preferred_element_type=jnp.float32)
            hs[0], cs[0] = act_gates(gates, cs[0])
            # Deeper layers: two accumulated dots (no lane concat).
            for l in range(1, L):
                gates = (jnp.dot(hs[l - 1].astype(compute_dtype), wxd[l - 1],
                                 preferred_element_type=jnp.float32)
                         + jnp.dot(hs[l].astype(compute_dtype), whd[l - 1],
                                   preferred_element_type=jnp.float32)
                         + bd[l - 1])
                hs[l], cs[l] = act_gates(gates, cs[l])
            if return_sequences:
                # out_t = sum_l h_l @ Wrs_l + b_rs   (no feature-axis concat)
                acc = brs
                for l in range(L):
                    acc = acc + jnp.dot(hs[l].astype(compute_dtype), wrs[l],
                                        preferred_element_type=jnp.float32)
                outs.append(acc)
            else:
                # TODO(synk): when return_sequences=False and F < 128, pad the
                # lane dim to 128 (or pack timesteps) to avoid masked stores.
                outs.append(hs[L - 1])

        # ONE dense store of the whole (tb, bb, feat) block.
        out_ref[...] = jnp.stack(outs, axis=0).astype(out_ref.dtype)

        # Carry state to the next time block.
        for l in range(L):
            h_scr[l] = hs[l]
            c_scr[l] = cs[l]

        # Final-state outputs written only on the last time block (of each
        # batch block).
        @pl.when(tblk == pl.num_programs(1) - 1)
        def _():
            hT_ref[...] = h_scr[...]
            cT_ref[...] = c_scr[...]

    return kernel


def _pick_time_block(T, requested=None, max_tb=32):
    if requested is not None:
        assert T % requested == 0, "time_block must divide seqlen"
        return requested
    tb = min(T, max_tb)
    while T % tb:
        tb -= 1
    return tb


def fused_lstm(xproj, wh0, wxd, whd, bd, wrs, brs, h0, c0, *,
               return_sequences=True, time_block=None, batch_block=None,
               compute_dtype=jnp.float32, vmem_limit_bytes=None):
    """Runs all LSTM layers (+ optional rs projection) in one pallas_call.

    xproj: (T, B, 4F)          layer-0 gates from x (both biases included)
    wh0:   (F, 4F)             layer-0 recurrent weight
    wxd:   (max(L-1,1), F, 4F) Wx for layers 1..L-1 (dummy if L == 1)
    whd:   (max(L-1,1), F, 4F) Wh for layers 1..L-1 (dummy if L == 1)
    bd:    (max(L-1,1), 1, 4F) bx + bh for layers 1..L-1
    wrs:   (L, F, D0)          rs weight split per layer
    brs:   (1, D0)
    h0/c0: (L, B, F)
    """
    T, B, F4 = xproj.shape
    L, _, nf = h0.shape
    d_out = wrs.shape[2]
    out_feat = d_out if return_sequences else nf

    tb = _pick_time_block(T, time_block)
    n_tblocks = T // tb

    # Batch blocking: gives the v7x second TensorCore independent work when the
    # batch is large (sub-batch blocks must be sublane aligned).
    if batch_block is None or batch_block >= B:
        bb = B
    else:
        assert B % batch_block == 0, "batch_block must divide batch"
        assert batch_block % 8 == 0, "sub-batch blocks must be multiples of 8"
        bb = batch_block
    nb = B // bb

    kernel = _make_fused_lstm_kernel(L, nf, tb, return_sequences,
                                     compute_dtype)
    grid_spec = pltpu.PrefetchScalarGridSpec(
        num_scalar_prefetch=0,
        grid=(nb, n_tblocks),
        in_specs=[
            pl.BlockSpec((tb, bb, F4), lambda b, t: (t, b, 0)),    # xproj
            pl.BlockSpec(wh0.shape, lambda b, t: (0, 0)),          # wh0
            pl.BlockSpec(wxd.shape, lambda b, t: (0, 0, 0)),       # wx deep
            pl.BlockSpec(whd.shape, lambda b, t: (0, 0, 0)),       # wh deep
            pl.BlockSpec(bd.shape, lambda b, t: (0, 0, 0)),        # b deep
            pl.BlockSpec(wrs.shape, lambda b, t: (0, 0, 0)),       # wrs split
            pl.BlockSpec(brs.shape, lambda b, t: (0, 0)),          # brs
            pl.BlockSpec((L, bb, nf), lambda b, t: (0, b, 0)),     # h0
            pl.BlockSpec((L, bb, nf), lambda b, t: (0, b, 0)),     # c0
        ],
        out_specs=[
            pl.BlockSpec((tb, bb, out_feat), lambda b, t: (t, b, 0)),  # seq
            pl.BlockSpec((L, bb, nf), lambda b, t: (0, b, 0)),         # h_T
            pl.BlockSpec((L, bb, nf), lambda b, t: (0, b, 0)),         # c_T
        ],
        scratch_shapes=[pltpu.VMEM((L, bb, nf), jnp.float32),
                        pltpu.VMEM((L, bb, nf), jnp.float32)],
    )
    return pl.pallas_call(
        kernel,
        out_shape=(jax.ShapeDtypeStruct((T, B, out_feat), jnp.float32),
                   jax.ShapeDtypeStruct((L, B, nf), jnp.float32),
                   jax.ShapeDtypeStruct((L, B, nf), jnp.float32)),
        grid_spec=grid_spec,
        compiler_params=pltpu.CompilerParams(
            # batch axis parallel (v7x megacore); time axis serial carry.
            dimension_semantics=("parallel", "arbitrary"),
            vmem_limit_bytes=vmem_limit_bytes),
    )(xproj, wh0, wxd, whd, bd, wrs, brs, h0, c0)


# ----------------------------------------------------------------------------
# Module wrapper (mirror of MLSTMCell.forward)
# ----------------------------------------------------------------------------
def mlstm_forward(x, hidden_state, params, input_shape, input_channels,
                  num_layers, return_sequences=True, time_block=None,
                  batch_block=None, compute_dtype=jnp.float32):
    """x: (T, B, C, H, W). Returns (next_hidden, current_input)."""
    T, B = x.shape[0], x.shape[1]
    L = num_layers
    D0 = input_shape[0] * input_shape[1] * input_channels

    wx0, bx0, wh0, bh0 = params["cells"][0]
    F = wh0.shape[0]
    cd = compute_dtype

    # Hoisted layer-0 input projection: one batched (T*B, D0) x (D0, 4F)
    # matmul, with both biases folded in.
    x_flat = x.reshape(T * B, D0)
    xproj = linear(x_flat, wx0, bx0 + bh0).reshape(T, B, 4 * F)

    # Deeper layers: separate Wx / Wh (no in-kernel concat) and summed bias.
    if L > 1:
        wxd = jnp.stack([params["cells"][l][0] for l in range(1, L)], axis=0)
        whd = jnp.stack([params["cells"][l][2] for l in range(1, L)], axis=0)
        bd = jnp.stack([params["cells"][l][1] + params["cells"][l][3]
                        for l in range(1, L)], axis=0)
    else:
        wxd = jnp.zeros((1, F, 4 * F), jnp.float32)               # unused
        whd = jnp.zeros((1, F, 4 * F), jnp.float32)
        bd = jnp.zeros((1, 1, 4 * F), jnp.float32)

    # return_sequences weight split per layer.  torch.cat((new, old), 2)
    # places layer l's features at rows [(L-1-l)*F, (L-l)*F) of w_rs.
    w_rs, b_rs = params["rs"]
    wrs_split = jnp.stack([w_rs[(L - 1 - l) * F:(L - l) * F, :]
                           for l in range(L)], axis=0)            # (L, F, D0)

    h0 = jnp.stack([hidden_state[l][0] for l in range(L)], axis=0)
    c0 = jnp.stack([hidden_state[l][1] for l in range(L)], axis=0)

    # Pre-cast matmul operand weights in the wrapper (bf16 on v6e/v7x halves
    # weight DMA/VMEM and removes per-block in-kernel casts).
    out_seq, hT, cT = fused_lstm(
        xproj, wh0.astype(cd), wxd.astype(cd), whd.astype(cd), bd,
        wrs_split.astype(cd), b_rs, h0, c0,
        return_sequences=return_sequences, time_block=time_block,
        batch_block=batch_block, compute_dtype=cd)

    next_hidden = [(hT[l], cT[l]) for l in range(L)]
    if return_sequences:
        current = out_seq.reshape(T, B, input_channels,
                                  input_shape[0], input_shape[1])
    else:
        current = out_seq                                         # (T, B, F)
    return next_hidden, current


# ----------------------------------------------------------------------------
# Pure-JAX reference (for correctness check)
# ----------------------------------------------------------------------------
def mlstm_reference(x, hidden_state, params, input_shape, input_channels,
                    num_layers, return_sequences=True):
    T, B = x.shape[0], x.shape[1]
    cur = x.reshape(T, B, -1)
    next_hidden = []
    hidden_concat = None
    for l in range(num_layers):
        h, c = hidden_state[l]
        wx, bx, wh, bh = params["cells"][l]
        outs = []
        for t in range(T):
            gates = cur[t] @ wx + bx + h @ wh + bh
            i, f, g, o = jnp.split(gates, 4, axis=1)
            i = jax.nn.sigmoid(i)
            f = jax.nn.sigmoid(f)
            g = jnp.tanh(g)
            o = jax.nn.sigmoid(o)
            c = c * f + i * g
            h = o * jnp.tanh(c)
            outs.append(h)
        next_hidden.append((h, c))
        cur = jnp.stack(outs, 0)
        hidden_concat = cur if hidden_concat is None else jnp.concatenate(
            [cur, hidden_concat], axis=2)
    if not return_sequences:
        return next_hidden, cur
    w_rs, b_rs = params["rs"]
    out = hidden_concat.reshape(T * B, -1) @ w_rs + b_rs
    out = out.reshape(T, B, input_channels, input_shape[0], input_shape[1])
    return next_hidden, out


# ----------------------------------------------------------------------------
# Main
# ----------------------------------------------------------------------------
if __name__ == "__main__":
    # Config consistent with the module's forward:
    #   input_shape=(H,W)=(8,8), input_channels=2, num_features=32,
    #   num_layers=2, return_sequences=True, seqlen=8, batch=2
    H, W, C = 8, 8, 2
    F = 32
    L = 2
    T = 8
    B = 2
    D0 = H * W * C              # 128
    stdv = 1.0 / (F ** 0.5)

    key = jax.random.PRNGKey(0)
    keys = jax.random.split(key, 16)

    # LSTM cell params (torch Linear stored transposed: (in, out) layout)
    cells = []
    kidx = 0
    for l in range(L):
        in_dim = D0 if l == 0 else F
        wx = jax.random.uniform(keys[kidx], (in_dim, 4 * F),
                                minval=-stdv, maxval=stdv, dtype=jnp.float32)
        bx = jax.random.uniform(keys[kidx + 1], (1, 4 * F),
                                minval=-stdv, maxval=stdv, dtype=jnp.float32)
        wh = jax.random.uniform(keys[kidx + 2], (F, 4 * F),
                                minval=-stdv, maxval=stdv, dtype=jnp.float32)
        bh = jax.random.uniform(keys[kidx + 3], (1, 4 * F),
                                minval=-stdv, maxval=stdv, dtype=jnp.float32)
        cells.append((wx, bx, wh, bh))
        kidx += 4

    # return_sequences linear: Linear(F*L -> H*W*C)
    rs_stdv = 1.0 / ((F * L) ** 0.5)
    w_rs = jax.random.uniform(keys[kidx], (F * L, D0),
                              minval=-rs_stdv, maxval=rs_stdv,
                              dtype=jnp.float32)
    b_rs = jax.random.uniform(keys[kidx + 1], (1, D0),
                              minval=-rs_stdv, maxval=rs_stdv,
                              dtype=jnp.float32)
    params = {"cells": cells, "rs": (w_rs, b_rs)}

    # init_hidden: zeros per layer
    hidden_state = [(jnp.zeros((B, F), jnp.float32),
                     jnp.zeros((B, F), jnp.float32)) for _ in range(L)]

    # input: (seqlen, batch, C, H, W)
    x = jax.random.normal(keys[kidx + 2], (T, B, C, H, W), dtype=jnp.float32)

    # NOTE: pass compute_dtype=jnp.bfloat16 (and batch_block=B//2 at large B)
    # on v6e/v7x for full-rate MXU + both TensorCores; kept f32 / single batch
    # block here so the strict correctness check below holds at B=2.
    next_hidden, out_seq = mlstm_forward(
        x, hidden_state, params, (H, W), C, L, return_sequences=True)
    jax.block_until_ready(out_seq)
    for h, c in next_hidden:
        jax.block_until_ready(h)
        jax.block_until_ready(c)

    # Correctness check vs pure-JAX reference
    ref_hidden, ref_out = mlstm_reference(
        x, hidden_state, params, (H, W), C, L, return_sequences=True)
    assert jnp.allclose(out_seq, ref_out, rtol=1e-4, atol=1e-4)
    for (h, c), (rh, rc) in zip(next_hidden, ref_hidden):
        assert jnp.allclose(h, rh, rtol=1e-4, atol=1e-4)
        assert jnp.allclose(c, rc, rtol=1e-4, atol=1e-4)

    print("KERNEL_OK")
</pallas_src>

<mosaic_0001>
module attributes {stable_mosaic.version = 11 : i64} {
  func.func @_linear_kernel(%arg0: memref<16x128xf32, #tpu.memory_space<vmem>>, %arg1: memref<128x128xf32, #tpu.memory_space<vmem>>, %arg2: memref<1x128xf32, #tpu.memory_space<vmem>>, %arg3: memref<16x128xf32, #tpu.memory_space<vmem>>) attributes {dimension_semantics = [], scalar_prefetch = 0 : i64, scratch_operands = 0 : i64, tpu.core_type = #tpu.core_type<tc>} {
    %c0 = arith.constant 0 : index
    %c0_0 = arith.constant 0 : index
    %0 = vector.load %arg0[%c0, %c0_0] : memref<16x128xf32, #tpu.memory_space<vmem>>, vector<16x128xf32>
    %c0_1 = arith.constant 0 : index
    %c0_2 = arith.constant 0 : index
    %1 = vector.load %arg1[%c0_1, %c0_2] : memref<128x128xf32, #tpu.memory_space<vmem>>, vector<128x128xf32>
    %cst = arith.constant dense<0.000000e+00> : vector<16x128xf32>
    %2 = tpu.matmul %0, %1, %cst {dimension_numbers = #tpu.dot_dimension_numbers<[1], [0], [0], [1], [0, 0, 1, 1], [], []>} : vector<16x128xf32>, vector<128x128xf32>, vector<16x128xf32> -> vector<16x128xf32>
    %c0_3 = arith.constant 0 : index
    %c0_4 = arith.constant 0 : index
    %3 = vector.load %arg2[%c0_3, %c0_4] : memref<1x128xf32, #tpu.memory_space<vmem>>, vector<1x128xf32>
    %4 = vector.broadcast %3 : vector<1x128xf32> to vector<16x128xf32>
    %5 = arith.addf %2, %4 : vector<16x128xf32>
    %c0_5 = arith.constant 0 : index
    %c0_6 = arith.constant 0 : index
    %6 = vector.load %arg3[%c0_5, %c0_6] : memref<16x128xf32, #tpu.memory_space<vmem>>, vector<16x128xf32>
    tpu.vector_store %arg3[%c0_5, %c0_6], %5 {strides = array<i32>} : memref<16x128xf32, #tpu.memory_space<vmem>>, vector<16x128xf32>,
    return
  }
}

</mosaic_0001>

<llo_original>
// kernel: tpu_custom_call.1
$region0: #{tpu_custom_call.1}
  #allocation0 [shape = 'u32[]', space=smem, size = 0x4, offset = 0x4, fixed_abs, tag = 'smem constant byte address 0x4 - core index']
  #allocation1 [shape = 'u32[72,128]{1,0:T(1,128)}', space=vmem, size = 0x9000, scoped, tag = 'internal scratch']
  %s0 = inlined_call_operand.hbm [shape: f32[16,128], index: 0, kind: input, shape index: {}]
  %s1 = inlined_call_operand.hbm [shape: f32[128,128], index: 1, kind: input, shape index: {}]
  %s2 = inlined_call_operand.vmem [shape: f32[1,128], index: 2, kind: input, shape index: {}]
  %s3 = inlined_call_operand.hbm [shape: f32[16,128], index: 3, kind: output, shape index: {}]
  %s4 = sld [smem:[#allocation0]]
  $region30: #{tpu_custom_call.1} parent=0
    _
  %s6 = ssub.s32 1, %s4
  %s7 = scalar_select 0, %s6, %s4
  $region1: #{tpu_custom_call.1} parent=0
    #allocation2 [shape = 'u8[8192]{0}', space=vmem, size = 0x2000, scoped, tag = 'input window, operand 0, single buffered']
    #allocation3 [shape = 's32[1]{0}', space=sflag, size = 0x4, scoped, tag = 'scoped memory for tpu_custom_call.1']
    #allocation4 [shape = 's32[1]{0}', space=sflag, size = 0x4, scoped, tag = 'scoped memory for tpu_custom_call.1']
    #allocation5 [shape = 'u8[65536]{0}', space=vmem, size = 0x10000, scoped, tag = 'input window, operand 1, single buffered']
    #allocation6 [shape = 's32[1]{0}', space=sflag, size = 0x4, scoped, tag = 'scoped memory for tpu_custom_call.1']
    #allocation7 [shape = 'u8[8192]{0}', space=vmem, size = 0x2000, scoped, tag = 'output window, operand 0, single buffered']
    %8 = vsyncpa [#allocation3], 0
    %9 = vsyncpa [#allocation6], 0
    %10 = vsyncpa [#allocation4], 0
    // Predicated region
    $region2: #{tpu_custom_call.1} parent=1 // pred_check
      _
    $region3: #{tpu_custom_call.1} parent=1 // pred_check_branch
      %12 = sbr.rel (0) target = $region5
    $region4: #{tpu_custom_call.1} parent=1 // pred_region
      %14 = vsyncadd [#allocation3], 0
      %s15 = sshll.u32 %s0, 4
      %s16 = int_to_ptr.hbm [resolvable:$true] %s15
      %s17 = sshll.u32 [#allocation2], 4
      %s18 = int_to_ptr.vmem [resolvable:$true] %s17
      %23 = dma.hbm_to_vmem [thread:$0]  %s16, 256, %s18, [#allocation3], 128, 128, 8
    $region5: #{tpu_custom_call.1} parent=1 // pred_fallthru
      _
    // Predicated region
    $region6: #{tpu_custom_call.1} parent=1 // pred_check
      _
    $region7: #{tpu_custom_call.1} parent=1 // pred_check_branch
      %25 = sbr.rel (0) target = $region9
    $region8: #{tpu_custom_call.1} parent=1 // pred_region
      %27 = vsyncadd [#allocation6], 0
      %s28 = sshll.u32 %s1, 4
      %s29 = int_to_ptr.hbm [resolvable:$true] %s28
      %s30 = sshll.u32 [#allocation5], 4
      %s31 = int_to_ptr.vmem [resolvable:$true] %s30
      %36 = dma.hbm_to_vmem [thread:$0]  %s29, 2048, %s31, [#allocation6], 128, 128, 8
    $region9: #{tpu_custom_call.1} parent=1 // pred_fallthru
      _
    // Predicated region
    $region10: #{tpu_custom_call.1} parent=1 // pred_check
      _
    $region11: #{tpu_custom_call.1} parent=1 // pred_check_branch
      %38 = sbr.rel (0) target = $region13
    $region12: #{tpu_custom_call.1} parent=1 // pred_region
      _
    $region13: #{tpu_custom_call.1} parent=1 // pred_fallthru
      _
    // Predicated region
    $region14: #{tpu_custom_call.1} parent=1 // pred_check
      _
    $region15: #{tpu_custom_call.1} parent=1 // pred_check_branch
      %40 = sbr.rel (0) target = $region17
    $region16: #{tpu_custom_call.1} parent=1 // pred_region
      %42 = dma.done [#allocation3], 256
    $region17: #{tpu_custom_call.1} parent=1 // pred_fallthru
      _
    // Predicated region
    $region18: #{tpu_custom_call.1} parent=1 // pred_check
      _
    $region19: #{tpu_custom_call.1} parent=1 // pred_check_branch
      %44 = sbr.rel (0) target = $region21
    $region20: #{tpu_custom_call.1} parent=1 // pred_region
      %46 = dma.done [#allocation6], 2048
    $region21: #{tpu_custom_call.1} parent=1 // pred_fallthru
      _
    %v47 = vld [vmem:[#allocation2] sm:$0xff]
    %v48 = vld [vmem:[#allocation2 + $0x8] sm:$0xff]
    %v49 = vld [vmem:[#allocation5] sm:$0xff]
    %v50 = vld [vmem:[#allocation5 + $0x8] sm:$0xff]
    %v51 = vld [vmem:[#allocation5 + $0x10] sm:$0xff]
    %v52 = vld [vmem:[#allocation5 + $0x18] sm:$0xff]
    %v53 = vld [vmem:[#allocation5 + $0x20] sm:$0xff]
    %v54 = vld [vmem:[#allocation5 + $0x28] sm:$0xff]
    %v55 = vld [vmem:[#allocation5 + $0x30] sm:$0xff]
    %v56 = vld [vmem:[#allocation5 + $0x38] sm:$0xff]
    %v57 = vld [vmem:[#allocation5 + $0x40] sm:$0xff]
    %v58 = vld [vmem:[#allocation5 + $0x48] sm:$0xff]
    %v59 = vld [vmem:[#allocation5 + $0x50] sm:$0xff]
    %v60 = vld [vmem:[#allocation5 + $0x58] sm:$0xff]
    %v61 = vld [vmem:[#allocation5 + $0x60] sm:$0xff]
    %v62 = vld [vmem:[#allocation5 + $0x68] sm:$0xff]
    %v63 = vld [vmem:[#allocation5 + $0x70] sm:$0xff]
    %v64 = vld [vmem:[#allocation5 + $0x78] sm:$0xff]
    %v65 = vld [vmem:[%s2] sm:$0x1]
    %v67 = vperm.slane %v65, 0
    %69 = vmatpush.msra.mxu0 %v64
    %70 = vmatpush.msra.mxu0 %v63
    %71 = vmatpush.msra.mxu0 %v62
    %72 = vmatpush.msra.mxu0 %v61
    %73 = vmatpush.msra.mxu0 %v60
    %74 = vmatpush.msra.mxu0 %v59
    %75 = vmatpush.msra.mxu0 %v58
    %76 = vmatpush.msra.mxu0 %v57
    %77 = vmatpush.msra.mxu0 %v56
    %78 = vmatpush.msra.mxu0 %v55
    %79 = vmatpush.msra.mxu0 %v54
    %80 = vmatpush.msra.mxu0 %v53
    %81 = vmatpush.msra.mxu0 %v52
    %82 = vmatpush.msra.mxu0 %v51
    %83 = vmatpush.msra.mxu0 %v50
    %84 = vmatpush.msra.mxu0 %v49
    %85 = vmatmul.f32.gmra.mxu0 %v47
    %v86 = vpop.f32.mrf.mxu0
    %v87 = vadd.f32 %v67, %v86
    %88 = vmatmul.f32.gmra.mxu0 %v48
    %v89 = vpop.f32.mrf.mxu0
    %v90 = vadd.f32 %v67, %v89
    %91 = vdwg.mxu0
    %92 = vst [vmem:[#allocation7] sm:$0xff] %v87
    %93 = vst [vmem:[#allocation7 + $0x8] sm:$0xff] %v90
    // Predicated region
    $region22: #{tpu_custom_call.1} parent=1 // pred_check
      _
    $region23: #{tpu_custom_call.1} parent=1 // pred_check_branch
      %95 = sbr.rel (0) target = $region25
    $region24: #{tpu_custom_call.1} parent=1 // pred_region
      %97 = vsyncadd [#allocation4], 0
      %s98 = sshll.u32 [#allocation7], 4
      %s99 = int_to_ptr.vmem [resolvable:$true] %s98
      %s100 = sshll.u32 %s3, 4
      %s101 = int_to_ptr.hbm [resolvable:$true] %s100
      %106 = dma.vmem_to_hbm [thread:$0]  %s99, 256, %s101, [#allocation4], 128, 128, 8
    $region25: #{tpu_custom_call.1} parent=1 // pred_fallthru
      _
    // Predicated region
    $region26: #{tpu_custom_call.1} parent=1 // pred_check
      _
    $region27: #{tpu_custom_call.1} parent=1 // pred_check_branch
      %108 = sbr.rel (0) target = $region29
    $region28: #{tpu_custom_call.1} parent=1 // pred_region
      %110 = dma.done [#allocation4], 256
    $region29: #{tpu_custom_call.1} parent=1 // pred_fallthru
      _
    %111 = vsyncpa [#allocation3], 1
    %112 = vsyncpa [#allocation6], 1
    %113 = vsyncpa [#allocation4], 1

</llo_original>
